<compile_context>
chip_gen: v7x
topology: tpu7x:2x2x1
jax: 0.10.0
libtpu: 0.0.40
codegen_flags: <defaults>
</compile_context>

<pallas_src>
import jax
import jax.numpy as jnp
from jax.experimental import pallas as pl
from jax.experimental.pallas import tpu as pltpu

LANE = 128  # TPU lane width; the second GEMM's N dim is padded to this.


def _round_up(v, m):
    return ((v + m - 1) // m) * m


def _pick_block_b(B, block_b):
    """Batch tile: multiple of 8 (or full extent), >=2 grid steps when B > 8
    (so both v7x TensorCores get work), capped at 2048 rows (VMEM footprint at
    2048 rows is ~3 MiB double-buffered -- far below every generation's
    budget; bigger tiles only amortize the ~0.35us per-step overhead)."""
    if block_b is not None:
        tb = _round_up(int(block_b), 8)
        return B if tb >= B else tb
    if B <= 8:
        return B
    tb = min(_round_up(pl.cdiv(B, 2), 8), 2048)
    return B if tb >= B else tb


def branch_kernel(x_ref, w1_ref, b1_ref, w2_ref, b2_ref, o_ref):
    # GEMM1 (K = in_features) -> f32 bias + ReLU -> lane-aligned GEMM2, then
    # store only the first C columns directly into the (tb, C) output block
    # (masked vst; no padded HBM writeback, no separate slice kernel).
    h = jnp.dot(x_ref[...], w1_ref[...], preferred_element_type=jnp.float32)
    h = jnp.maximum(h + b1_ref[...], 0.0)                 # f32 epilogue (VPU)
    y = jnp.dot(h.astype(w2_ref.dtype), w2_ref[...],
                preferred_element_type=jnp.float32)
    c = o_ref.shape[-1]
    o_ref[...] = (y[:, :c] + b2_ref[...]).astype(o_ref.dtype)


def prepare_branch_params(w1_t, b1, w2_t, b2, compute_dtype=jnp.bfloat16):
    """One-time (hoisted) weight prep -- do NOT call per forward.

    * Casts the matmul operands (w1_t, w2_t) to `compute_dtype`
      (bf16 by default; pass None / jnp.float32 for full-precision heads).
    * Keeps biases in f32 (bias + ReLU epilogue stays f32 everywhere, so
      v5e's lack of a bf16 VPU path is irrelevant).
    * Lane-pads w2_t's output dim to a multiple of 128 so the second GEMM is
      lane-aligned; b2 stays at the true class count C.
    Works for single-head 2-D weights and head-stacked 3-D weights.
    """
    C = w2_t.shape[-1]
    c_pad = _round_up(max(C, LANE), LANE)
    if c_pad != C:
        pad = [(0, 0)] * (w2_t.ndim - 1) + [(0, c_pad - C)]
        w2_t = jnp.pad(w2_t, pad)
    cd = w1_t.dtype if compute_dtype is None else compute_dtype
    return (w1_t.astype(cd), b1.astype(jnp.float32),
            w2_t.astype(cd), b2.astype(jnp.float32))


def branch_forward(x, w1_t, b1, w2_t, b2, *, block_b=None):
    """Fused linear1 -> ReLU -> linear2 for one head.

    Params must come from `prepare_branch_params` (w1_t: (F, H); b1: (1, H);
    w2_t: (H, c_pad) lane-padded; b2: (1, C) f32).  x: (B, F) -> (B, C).
    x is cast to the weight dtype (halves its DMA bytes on the bf16 path);
    the output keeps x's original dtype.
    """
    B, F = x.shape
    H = w1_t.shape[-1]
    c_pad = w2_t.shape[-1]
    C = b2.shape[-1]
    assert c_pad % LANE == 0, "w2_t must be lane-padded via prepare_branch_params"
    out_dtype = x.dtype
    if x.dtype != w1_t.dtype:
        x = x.astype(w1_t.dtype)

    tb = _pick_block_b(B, block_b)
    grid = (pl.cdiv(B, tb),)

    itemsize = jnp.dtype(w1_t.dtype).itemsize
    flops = 2 * B * (F * H + H * c_pad)
    bytes_accessed = (B * F * itemsize + F * H * itemsize + H * c_pad * itemsize
                      + 4 * (H + C) + B * C * jnp.dtype(out_dtype).itemsize)

    return pl.pallas_call(
        branch_kernel,
        out_shape=jax.ShapeDtypeStruct((B, C), out_dtype),
        grid=grid,
        in_specs=[
            pl.BlockSpec((tb, F), lambda i: (i, 0)),      # batch-tiled input
            pl.BlockSpec((F, H), lambda i: (0, 0)),       # weights resident
            pl.BlockSpec((1, H), lambda i: (0, 0)),       # bias resident
            pl.BlockSpec((H, c_pad), lambda i: (0, 0)),   # weights resident
            pl.BlockSpec((1, C), lambda i: (0, 0)),       # bias resident
        ],
        out_specs=pl.BlockSpec((tb, C), lambda i: (i, 0)),
        compiler_params=pltpu.CompilerParams(
            dimension_semantics=("parallel",)),
        cost_estimate=pl.CostEstimate(flops=flops, transcendentals=0,
                                      bytes_accessed=bytes_accessed),
    )(x, w1_t, b1, w2_t, b2)


def branch_forward_multihead(x, w1_t, b1, w2_t, b2, *, block_b=None):
    """Many homogeneous Branch heads fused into one pallas_call.

    x: (B, F) shared Stem output; w1_t: (N, F, H); b1: (N, 1, H);
    w2_t: (N, H, c_pad) lane-padded; b2: (N, 1, C) f32  ->  (N, B, C).
    Grid = (batch_tiles, heads) with heads innermost so the x tile stays
    resident in VMEM while each head's weights stream in (auto-pipelined).
    """
    B, F = x.shape
    N, _, H = w1_t.shape
    c_pad = w2_t.shape[-1]
    C = b2.shape[-1]
    assert c_pad % LANE == 0, "w2_t must be lane-padded via prepare_branch_params"
    out_dtype = x.dtype
    if x.dtype != w1_t.dtype:
        x = x.astype(w1_t.dtype)

    tb = _pick_block_b(B, block_b)
    grid = (pl.cdiv(B, tb), N)

    itemsize = jnp.dtype(w1_t.dtype).itemsize
    flops = 2 * N * B * (F * H + H * c_pad)
    bytes_accessed = (B * F * itemsize
                      + N * (F * H + H * c_pad) * itemsize
                      + N * 4 * (H + C)
                      + N * B * C * jnp.dtype(out_dtype).itemsize)

    return pl.pallas_call(
        branch_kernel,
        out_shape=jax.ShapeDtypeStruct((N, B, C), out_dtype),
        grid=grid,
        in_specs=[
            pl.BlockSpec((tb, F), lambda i, h: (i, 0)),          # x resident per tile
            pl.BlockSpec((None, F, H), lambda i, h: (h, 0, 0)),  # per-head weights
            pl.BlockSpec((None, 1, H), lambda i, h: (h, 0, 0)),
            pl.BlockSpec((None, H, c_pad), lambda i, h: (h, 0, 0)),
            pl.BlockSpec((None, 1, C), lambda i, h: (h, 0, 0)),
        ],
        out_specs=pl.BlockSpec((None, tb, C), lambda i, h: (h, i, 0)),
        compiler_params=pltpu.CompilerParams(
            dimension_semantics=("parallel", "parallel")),
        cost_estimate=pl.CostEstimate(flops=flops, transcendentals=0,
                                      bytes_accessed=bytes_accessed),
    )(x, w1_t, b1, w2_t, b2)


def init_branch_params(key, in_features, out_features, hidden_dims=256,
                       dtype=jnp.float32):
    """Deterministic init mirroring nn.Linear's U(-1/sqrt(fan_in), 1/sqrt(fan_in)).
    Weights are stored in (in, out) layout (PyTorch stores (out, in); we pass W.T)."""
    k1, k2, k3, k4 = jax.random.split(key, 4)
    bound1 = 1.0 / jnp.sqrt(in_features)
    bound2 = 1.0 / jnp.sqrt(hidden_dims)
    w1_t = jax.random.uniform(k1, (in_features, hidden_dims), dtype,
                              minval=-bound1, maxval=bound1)
    b1 = jax.random.uniform(k2, (1, hidden_dims), dtype,
                            minval=-bound1, maxval=bound1)
    w2_t = jax.random.uniform(k3, (hidden_dims, out_features), dtype,
                              minval=-bound2, maxval=bound2)
    b2 = jax.random.uniform(k4, (1, out_features), dtype,
                            minval=-bound2, maxval=bound2)
    return w1_t, b1, w2_t, b2


if __name__ == "__main__":
    batch = 8
    in_features = 32
    hidden_dims = 256     # module default
    out_features = 8      # number of classes for this head

    key = jax.random.PRNGKey(0)
    kx, kp, kh = jax.random.split(key, 3)
    x = jax.random.normal(kx, (batch, in_features), jnp.float32)
    w1_t, b1, w2_t, b2 = init_branch_params(kp, in_features, out_features,
                                            hidden_dims)
    ref = jnp.maximum(x @ w1_t + b1, 0.0) @ w2_t + b2

    # 1) Full-precision path (compute_dtype=None), small batch (single tile).
    p32 = prepare_branch_params(w1_t, b1, w2_t, b2, compute_dtype=None)
    out = jax.block_until_ready(branch_forward(x, *p32))
    assert out.shape == (batch, out_features)
    assert jnp.allclose(out, ref, atol=1e-5, rtol=1e-5), "f32 mismatch"

    # 2) Default bf16-compute path (f32 accumulate + f32 epilogue, f32 output).
    pbf = prepare_branch_params(w1_t, b1, w2_t, b2)          # bf16 default
    outbf = jax.block_until_ready(branch_forward(x, *pbf))
    assert jnp.allclose(outbf, ref, atol=5e-2, rtol=5e-2), "bf16 mismatch"

    # 3) Tiled path: larger batch, user tile not dividing B (partial block) and
    #    default auto-tile (>=2 grid steps for v7x's two TensorCores).
    xb = jax.random.normal(kx, (272, in_features), jnp.float32)
    refb = jnp.maximum(xb @ w1_t + b1, 0.0) @ w2_t + b2
    outb = jax.block_until_ready(branch_forward(xb, *p32, block_b=128))
    assert outb.shape == (272, out_features)
    assert jnp.allclose(outb, refb, atol=1e-5, rtol=1e-5), "tiled mismatch"
    outb_auto = jax.block_until_ready(branch_forward(xb, *p32))
    assert jnp.allclose(outb_auto, refb, atol=1e-5, rtol=1e-5), "auto-tile mismatch"

    # 4) Fused multi-head variant: 3 heads in one pallas_call (bf16 compute).
    num_heads = 3
    head_keys = jax.random.split(kh, num_heads)
    heads = [init_branch_params(k, in_features, out_features, hidden_dims)
             for k in head_keys]
    w1s = jnp.stack([h[0] for h in heads])   # (N, F, H)
    b1s = jnp.stack([h[1] for h in heads])   # (N, 1, H)
    w2s = jnp.stack([h[2] for h in heads])   # (N, H, C)
    b2s = jnp.stack([h[3] for h in heads])   # (N, 1, C)
    pmh = prepare_branch_params(w1s, b1s, w2s, b2s)          # bf16 default
    outmh = jax.block_until_ready(branch_forward_multihead(x, *pmh))
    assert outmh.shape == (num_heads, batch, out_features)
    for n in range(num_heads):
        refn = jnp.maximum(x @ heads[n][0] + heads[n][1], 0.0) @ heads[n][2] + heads[n][3]
        assert jnp.allclose(outmh[n], refn, atol=5e-2, rtol=5e-2), f"head {n} mismatch"

    print("KERNEL_OK")
</pallas_src>

<mosaic_0001>
module attributes {stable_mosaic.version = 11 : i64} {
  func.func @branch_kernel(%arg0: i32, %arg1: memref<8x32xf32, #tpu.memory_space<vmem>>, %arg2: memref<32x256xf32, #tpu.memory_space<vmem>>, %arg3: memref<1x256xf32, #tpu.memory_space<vmem>>, %arg4: memref<256x128xf32, #tpu.memory_space<vmem>>, %arg5: memref<1x8xf32, #tpu.memory_space<vmem>>, %arg6: memref<8x8xf32, #tpu.memory_space<vmem>>) attributes {dimension_semantics = [#tpu.dimension_semantics<parallel>], iteration_bounds = array<i64: 1>, scalar_prefetch = 0 : i64, scratch_operands = 0 : i64, tpu.core_type = #tpu.core_type<tc>, window_params = [{transform_indices = @transform_0, window_bounds = array<i64: 8, 32>}, {pipeline_mode = #tpu.pipeline_mode<synchronous>, transform_indices = @transform_1, window_bounds = array<i64: 32, 256>}, {pipeline_mode = #tpu.pipeline_mode<synchronous>, transform_indices = @transform_2, window_bounds = array<i64: 1, 256>}, {pipeline_mode = #tpu.pipeline_mode<synchronous>, transform_indices = @transform_3, window_bounds = array<i64: 256, 128>}, {pipeline_mode = #tpu.pipeline_mode<synchronous>, transform_indices = @transform_4, window_bounds = array<i64: 1, 8>}, {transform_indices = @transform_5, window_bounds = array<i64: 8, 8>}]} {
    %c0 = arith.constant 0 : index
    %c0_0 = arith.constant 0 : index
    %0 = vector.load %arg1[%c0, %c0_0] : memref<8x32xf32, #tpu.memory_space<vmem>>, vector<8x32xf32>
    %c0_1 = arith.constant 0 : index
    %c0_2 = arith.constant 0 : index
    %1 = vector.load %arg2[%c0_1, %c0_2] : memref<32x256xf32, #tpu.memory_space<vmem>>, vector<32x256xf32>
    %cst = arith.constant dense<0.000000e+00> : vector<8x256xf32>
    %2 = tpu.matmul %0, %1, %cst {dimension_numbers = #tpu.dot_dimension_numbers<[1], [0], [0], [1], [0, 0, 1, 1], [], []>} : vector<8x32xf32>, vector<32x256xf32>, vector<8x256xf32> -> vector<8x256xf32>
    %c0_3 = arith.constant 0 : index
    %c0_4 = arith.constant 0 : index
    %3 = vector.load %arg3[%c0_3, %c0_4] : memref<1x256xf32, #tpu.memory_space<vmem>>, vector<1x256xf32>
    %4 = vector.broadcast %3 : vector<1x256xf32> to vector<8x256xf32>
    %5 = arith.addf %2, %4 : vector<8x256xf32>
    %cst_5 = arith.constant 0.000000e+00 : f32
    %6 = vector.broadcast %cst_5 : f32 to vector<8x256xf32>
    %7 = arith.maximumf %5, %6 : vector<8x256xf32>
    %c0_6 = arith.constant 0 : index
    %c0_7 = arith.constant 0 : index
    %8 = vector.load %arg4[%c0_6, %c0_7] : memref<256x128xf32, #tpu.memory_space<vmem>>, vector<256x128xf32>
    %cst_8 = arith.constant dense<0.000000e+00> : vector<8x128xf32>
    %9 = tpu.matmul %7, %8, %cst_8 {dimension_numbers = #tpu.dot_dimension_numbers<[1], [0], [0], [1], [0, 0, 1, 1], [], []>} : vector<8x256xf32>, vector<256x128xf32>, vector<8x128xf32> -> vector<8x128xf32>
    %10 = vector.extract_strided_slice %9 {offsets = [0, 0], sizes = [8, 8], strides = [1, 1]} : vector<8x128xf32> to vector<8x8xf32>
    %c0_9 = arith.constant 0 : index
    %c0_10 = arith.constant 0 : index
    %11 = vector.load %arg5[%c0_9, %c0_10] : memref<1x8xf32, #tpu.memory_space<vmem>>, vector<1x8xf32>
    %12 = vector.broadcast %11 : vector<1x8xf32> to vector<8x8xf32>
    %13 = arith.addf %10, %12 : vector<8x8xf32>
    %c0_11 = arith.constant 0 : index
    %c0_12 = arith.constant 0 : index
    %14 = vector.load %arg6[%c0_11, %c0_12] : memref<8x8xf32, #tpu.memory_space<vmem>>, vector<8x8xf32>
    tpu.vector_store %arg6[%c0_11, %c0_12], %13 {strides = array<i32>} : memref<8x8xf32, #tpu.memory_space<vmem>>, vector<8x8xf32>,
    return
  }
  func.func @transform_0(%arg0: i32) -> (i32, i32) {
    %c0_i32 = arith.constant 0 : i32
    %c0_i32_0 = arith.constant 0 : i32
    return %arg0, %c0_i32 : i32, i32
  }
  func.func @transform_1(%arg0: i32) -> (i32, i32) {
    %c0_i32 = arith.constant 0 : i32
    %c0_i32_0 = arith.constant 0 : i32
    %c0_i32_1 = arith.constant 0 : i32
    return %c0_i32, %c0_i32_0 : i32, i32
  }
  func.func @transform_2(%arg0: i32) -> (i32, i32) {
    %c0_i32 = arith.constant 0 : i32
    %c0_i32_0 = arith.constant 0 : i32
    %c0_i32_1 = arith.constant 0 : i32
    return %c0_i32, %c0_i32_0 : i32, i32
  }
  func.func @transform_3(%arg0: i32) -> (i32, i32) {
    %c0_i32 = arith.constant 0 : i32
    %c0_i32_0 = arith.constant 0 : i32
    %c0_i32_1 = arith.constant 0 : i32
    return %c0_i32, %c0_i32_0 : i32, i32
  }
  func.func @transform_4(%arg0: i32) -> (i32, i32) {
    %c0_i32 = arith.constant 0 : i32
    %c0_i32_0 = arith.constant 0 : i32
    %c0_i32_1 = arith.constant 0 : i32
    return %c0_i32, %c0_i32_0 : i32, i32
  }
  func.func @transform_5(%arg0: i32) -> (i32, i32) {
    %c0_i32 = arith.constant 0 : i32
    %c0_i32_0 = arith.constant 0 : i32
    return %arg0, %c0_i32 : i32, i32
  }
}

</mosaic_0001>

<llo_original>
// kernel: tpu_custom_call.1
$region0: #{tpu_custom_call.1}
  #allocation0 [shape = 'u32[]', space=smem, size = 0x4, offset = 0x4, fixed_abs, tag = 'smem constant byte address 0x4 - core index']
  #allocation1 [shape = 'u32[144,128]{1,0:T(1,128)}', space=vmem, size = 0x12000, scoped, tag = 'internal scratch']
  %s0 = inlined_call_operand.hbm [shape: f32[8,32], index: 0, kind: input, shape index: {}]
  %s1 = inlined_call_operand.hbm [shape: f32[32,256], index: 1, kind: input, shape index: {}]
  %s2 = inlined_call_operand.vmem [shape: f32[1,256], index: 2, kind: input, shape index: {}]
  %s3 = inlined_call_operand.hbm [shape: f32[256,128], index: 3, kind: input, shape index: {}]
  %s4 = inlined_call_operand.vmem [shape: f32[1,8], index: 4, kind: input, shape index: {}]
  %s5 = inlined_call_operand.hbm [shape: f32[8,8], index: 5, kind: output, shape index: {}]
  %s6 = sld [smem:[#allocation0]]
  $region42: #{tpu_custom_call.1} parent=0
    _
  %s8 = ssub.s32 1, %s6
  %s9 = scalar_select 0, %s8, %s6
  $region1: #{tpu_custom_call.1} parent=0
    #allocation2 [shape = 'u8[4096]{0}', space=vmem, size = 0x1000, scoped, tag = 'input window, operand 0, single buffered']
    #allocation3 [shape = 's32[1]{0}', space=sflag, size = 0x4, scoped, tag = 'scoped memory for tpu_custom_call.1']
    #allocation4 [shape = 's32[1]{0}', space=sflag, size = 0x4, scoped, tag = 'scoped memory for tpu_custom_call.1']
    #allocation5 [shape = 'u8[32768]{0}', space=vmem, size = 0x8000, scoped, tag = 'input window, operand 1, single buffered']
    #allocation6 [shape = 's32[1]{0}', space=sflag, size = 0x4, scoped, tag = 'scoped memory for tpu_custom_call.1']
    #allocation7 [shape = 'u8[131072]{0}', space=vmem, size = 0x20000, scoped, tag = 'input window, operand 3, single buffered']
    #allocation8 [shape = 'u8[4096]{0}', space=vmem, size = 0x1000, scoped, tag = 'output window, operand 0, single buffered']
    %10 = vsyncpa [#allocation3], 0
    %11 = vsyncpa [#allocation6], 0
    %12 = vsyncpa [#allocation4], 0
    // Predicated region
    $region2: #{tpu_custom_call.1} parent=1 // pred_check
      _
    $region3: #{tpu_custom_call.1} parent=1 // pred_check_branch
      %14 = sbr.rel (0) target = $region5
    $region4: #{tpu_custom_call.1} parent=1 // pred_region
      %s16 = ssub.s32 128, 128
      %17 = vsyncadd [#allocation3], %s16
      %s19 = sshll.u32 [#allocation2], 4
      %s20 = int_to_ptr.vmem [resolvable:$true] %s19
      %22 = dma.hbm_to_vmem [thread:$0]  %s0, 128, %s20, [#allocation3]
    $region5: #{tpu_custom_call.1} parent=1 // pred_fallthru
      _
    // Predicated region
    $region6: #{tpu_custom_call.1} parent=1 // pred_check
      _
    $region7: #{tpu_custom_call.1} parent=1 // pred_check_branch
      %24 = sbr.rel (0) target = $region9
    $region8: #{tpu_custom_call.1} parent=1 // pred_region
      %s26 = ssub.s32 1024, 1024
      %27 = vsyncadd [#allocation6], %s26
      %s28 = sshll.u32 [#allocation5], 4
      %s29 = int_to_ptr.vmem [resolvable:$true] %s28
      %34 = dma.hbm_to_vmem [thread:$0]  %s1, 1024, %s29, [#allocation6], 256, 256, 16
    $region9: #{tpu_custom_call.1} parent=1 // pred_fallthru
      _
    // Predicated region
    $region10: #{tpu_custom_call.1} parent=1 // pred_check
      _
    $region11: #{tpu_custom_call.1} parent=1 // pred_check_branch
      %36 = sbr.rel (0) target = $region13
    $region12: #{tpu_custom_call.1} parent=1 // pred_region
      _
    $region13: #{tpu_custom_call.1} parent=1 // pred_fallthru
      _
    // Predicated region
    $region14: #{tpu_custom_call.1} parent=1 // pred_check
      _
    $region15: #{tpu_custom_call.1} parent=1 // pred_check_branch
      %38 = sbr.rel (0) target = $region17
    $region16: #{tpu_custom_call.1} parent=1 // pred_region
      %s40 = ssub.s32 4096, 4096
      %41 = vsyncadd [#allocation6], %s40
      %s42 = sshll.u32 [#allocation7], 4
      %s43 = int_to_ptr.vmem [resolvable:$true] %s42
      %48 = dma.hbm_to_vmem [thread:$0]  %s3, 4096, %s43, [#allocation6], 128, 128, 8
    $region17: #{tpu_custom_call.1} parent=1 // pred_fallthru
      _
    // Predicated region
    $region18: #{tpu_custom_call.1} parent=1 // pred_check
      _
    $region19: #{tpu_custom_call.1} parent=1 // pred_check_branch
      %50 = sbr.rel (0) target = $region21
    $region20: #{tpu_custom_call.1} parent=1 // pred_region
      _
    $region21: #{tpu_custom_call.1} parent=1 // pred_fallthru
      _
    // Predicated region
    $region22: #{tpu_custom_call.1} parent=1 // pred_check
      _
    $region23: #{tpu_custom_call.1} parent=1 // pred_check_branch
      %52 = sbr.rel (0) target = $region25
    $region24: #{tpu_custom_call.1} parent=1 // pred_region
      %53 = dma.done [#allocation3], 128
    $region25: #{tpu_custom_call.1} parent=1 // pred_fallthru
      _
    // Predicated region
    $region26: #{tpu_custom_call.1} parent=1 // pred_check
      _
    $region27: #{tpu_custom_call.1} parent=1 // pred_check_branch
      %55 = sbr.rel (0) target = $region29
    $region28: #{tpu_custom_call.1} parent=1 // pred_region
      %56 = dma.done [#allocation6], 1024
    $region29: #{tpu_custom_call.1} parent=1 // pred_fallthru
      _
    // Predicated region
    $region30: #{tpu_custom_call.1} parent=1 // pred_check
      _
    $region31: #{tpu_custom_call.1} parent=1 // pred_check_branch
      %58 = sbr.rel (0) target = $region33
    $region32: #{tpu_custom_call.1} parent=1 // pred_region
      %59 = dma.done [#allocation6], 4096
    $region33: #{tpu_custom_call.1} parent=1 // pred_fallthru
      _
    %v60 = vld [vmem:[#allocation2] sm:$0xff]
    %v61 = vld [vmem:[#allocation5] sm:$0xff]
    %v62 = vld [vmem:[#allocation5 + $0x8] sm:$0xff]
    %v63 = vld [vmem:[#allocation5 + $0x10] sm:$0xff]
    %v64 = vld [vmem:[#allocation5 + $0x18] sm:$0xff]
    %v65 = vld [vmem:[#allocation5 + $0x20] sm:$0xff]
    %v66 = vld [vmem:[#allocation5 + $0x28] sm:$0xff]
    %v67 = vld [vmem:[#allocation5 + $0x30] sm:$0xff]
    %v68 = vld [vmem:[#allocation5 + $0x38] sm:$0xff]
    %v69 = vld [vmem:[%s2] sm:$0x3]
    %v71 = vlaneseq
    %v72 = vshrl.u32 %v71, 7
    %v73 = vsub.s32 0, %v72
    %v74 = vrot.slane %v69, %v73
    %v75 = vlaneseq
    %v76 = vshrl.u32 %v75, 7
    %v77 = vsub.s32 1, %v76
    %v78 = vrot.slane %v69, %v77
    %vm81 = vcmask 261120
    %v83 = vsel %vm81, %v60, 0
    %85 = vmatprep.subr.mxu0 %v62
    %86 = vmatpush1.msra.mxu0 %v61
    %87 = vmatprep.subr.mxu0 %v64
    %88 = vmatpush1.msra.mxu0 %v63
    %89 = vmatprep.subr.mxu0 %v66
    %90 = vmatpush1.msra.mxu0 %v65
    %91 = vmatprep.subr.mxu0 %v68
    %92 = vmatpush1.msra.mxu0 %v67
    %93 = vmatprep.subr.mxu0 0.0
    %94 = vmatpush1.msra.mxu0 0.0
    %95 = vmatprep.subr.mxu0 0.0
    %96 = vmatpush1.msra.mxu0 0.0
    %97 = vmatprep.subr.mxu0 0.0
    %98 = vmatpush1.msra.mxu0 0.0
    %99 = vmatprep.subr.mxu0 0.0
    %100 = vmatpush1.msra.mxu0 0.0
    %101 = vmatprep.subr.mxu0 0.0
    %102 = vmatpush1.msra.mxu0 0.0
    %103 = vmatprep.subr.mxu0 0.0
    %104 = vmatpush1.msra.mxu0 0.0
    %105 = vmatprep.subr.mxu0 0.0
    %106 = vmatpush1.msra.mxu0 0.0
    %107 = vmatprep.subr.mxu0 0.0
    %108 = vmatpush1.msra.mxu0 0.0
    %109 = vmatprep.subr.mxu0 0.0
    %110 = vmatpush1.msra.mxu0 0.0
    %111 = vmatprep.subr.mxu0 0.0
    %112 = vmatpush1.msra.mxu0 0.0
    %113 = vmatprep.subr.mxu0 0.0
    %114 = vmatpush1.msra.mxu0 0.0
    %115 = vmatprep.subr.mxu0 0.0
    %116 = vmatpush1.msra.mxu0 0.0
    %117 = vmatprep.subr.mxu0 0.0
    %118 = vmatpush1.msra.mxu0 0.0
    %119 = vmatprep.subr.mxu0 0.0
    %120 = vmatpush1.msra.mxu0 0.0
    %121 = vmatprep.subr.mxu0 0.0
    %122 = vmatpush1.msra.mxu0 0.0
    %123 = vmatprep.subr.mxu0 0.0
    %124 = vmatpush1.msra.mxu0 0.0
    %125 = vmatprep.subr.mxu0 0.0
    %126 = vmatpush1.msra.mxu0 0.0
    %127 = vmatprep.subr.mxu0 0.0
    %128 = vmatpush1.msra.mxu0 0.0
    %129 = vmatprep.subr.mxu0 0.0
    %130 = vmatpush1.msra.mxu0 0.0
    %131 = vmatprep.subr.mxu0 0.0
    %132 = vmatpush1.msra.mxu0 0.0
    %133 = vmatprep.subr.mxu0 0.0
    %134 = vmatpush1.msra.mxu0 0.0
    %135 = vmatprep.subr.mxu0 0.0
    %136 = vmatpush1.msra.mxu0 0.0
    %137 = vmatprep.subr.mxu0 0.0
    %138 = vmatpush1.msra.mxu0 0.0
    %139 = vmatprep.subr.mxu0 0.0
    %140 = vmatpush1.msra.mxu0 0.0
    %141 = vmatprep.subr.mxu0 0.0
    %142 = vmatpush1.msra.mxu0 0.0
    %143 = vmatprep.subr.mxu0 0.0
    %144 = vmatpush1.msra.mxu0 0.0
    %145 = vmatprep.subr.mxu0 0.0
    %146 = vmatpush1.msra.mxu0 0.0
    %147 = vmatprep.subr.mxu0 0.0
    %148 = vmatpush1.msra.mxu0 0.0
    %149 = vmatprep.mubr.f32.mxu0 0.0
    %150 = vmatmul.mubr.f32.gmra.mrb[0].mxu0 %v83
    %v151 = vpop.f32.mrb[0].mxu0
    %v152 = vadd.f32 %v74, %v151
    %v153 = vpop.f32.mrb[0].mxu0
    %v154 = vadd.f32 %v78, %v153
    %155 = vdwg.mxu0
    %v156 = vmax.f32 %v152, 0.0
    %v157 = vmax.f32 %v154, 0.0
    %v158 = vld [vmem:[#allocation7] sm:$0xff]
    %v159 = vld [vmem:[#allocation7 + $0x8] sm:$0xff]
    %v160 = vld [vmem:[#allocation7 + $0x10] sm:$0xff]
    %v161 = vld [vmem:[#allocation7 + $0x18] sm:$0xff]
    %v162 = vld [vmem:[#allocation7 + $0x20] sm:$0xff]
    %v163 = vld [vmem:[#allocation7 + $0x28] sm:$0xff]
    %v164 = vld [vmem:[#allocation7 + $0x30] sm:$0xff]
    %v165 = vld [vmem:[#allocation7 + $0x38] sm:$0xff]
    %v166 = vld [vmem:[#allocation7 + $0x40] sm:$0xff]
    %v167 = vld [vmem:[#allocation7 + $0x48] sm:$0xff]
    %v168 = vld [vmem:[#allocation7 + $0x50] sm:$0xff]
    %v169 = vld [vmem:[#allocation7 + $0x58] sm:$0xff]
    %v170 = vld [vmem:[#allocation7 + $0x60] sm:$0xff]
    %v171 = vld [vmem:[#allocation7 + $0x68] sm:$0xff]
    %v172 = vld [vmem:[#allocation7 + $0x70] sm:$0xff]
    %v173 = vld [vmem:[#allocation7 + $0x78] sm:$0xff]
    %v174 = vld [vmem:[#allocation7 + $0x80] sm:$0xff]
    %v175 = vld [vmem:[#allocation7 + $0x88] sm:$0xff]
    %v176 = vld [vmem:[#allocation7 + $0x90] sm:$0xff]
    %v177 = vld [vmem:[#allocation7 + $0x98] sm:$0xff]
    %v178 = vld [vmem:[#allocation7 + $0xa0] sm:$0xff]
    %v179 = vld [vmem:[#allocation7 + $0xa8] sm:$0xff]
    %v180 = vld [vmem:[#allocation7 + $0xb0] sm:$0xff]
    %v181 = vld [vmem:[#allocation7 + $0xb8] sm:$0xff]
    %v182 = vld [vmem:[#allocation7 + $0xc0] sm:$0xff]
    %v183 = vld [vmem:[#allocation7 + $0xc8] sm:$0xff]
    %v184 = vld [vmem:[#allocation7 + $0xd0] sm:$0xff]
    %v185 = vld [vmem:[#allocation7 + $0xd8] sm:$0xff]
    %v186 = vld [vmem:[#allocation7 + $0xe0] sm:$0xff]
    %v187 = vld [vmem:[#allocation7 + $0xe8] sm:$0xff]
    %v188 = vld [vmem:[#allocation7 + $0xf0] sm:$0xff]
    %v189 = vld [vmem:[#allocation7 + $0xf8] sm:$0xff]
    %190 = vmatprep.subr.mxu0 0.0
    %191 = vmatpush1.msra.mxu0 %v158
    %192 = vmatprep.subr.mxu0 0.0
    %193 = vmatpush1.msra.mxu0 %v159
    %194 = vmatprep.subr.mxu0 0.0
    %195 = vmatpush1.msra.mxu0 %v160
    %196 = vmatprep.subr.mxu0 0.0
    %197 = vmatpush1.msra.mxu0 %v161
    %198 = vmatprep.subr.mxu0 0.0
    %199 = vmatpush1.msra.mxu0 %v162
    %200 = vmatprep.subr.mxu0 0.0
    %201 = vmatpush1.msra.mxu0 %v163
    %202 = vmatprep.subr.mxu0 0.0
    %203 = vmatpush1.msra.mxu0 %v164
    %204 = vmatprep.subr.mxu0 0.0
    %205 = vmatpush1.msra.mxu0 %v165
    %206 = vmatprep.subr.mxu0 0.0
    %207 = vmatpush1.msra.mxu0 %v166
    %208 = vmatprep.subr.mxu0 0.0
    %209 = vmatpush1.msra.mxu0 %v167
    %210 = vmatprep.subr.mxu0 0.0
    %211 = vmatpush1.msra.mxu0 %v168
    %212 = vmatprep.subr.mxu0 0.0
    %213 = vmatpush1.msra.mxu0 %v169
    %214 = vmatprep.subr.mxu0 0.0
    %215 = vmatpush1.msra.mxu0 %v170
    %216 = vmatprep.subr.mxu0 0.0
    %217 = vmatpush1.msra.mxu0 %v171
    %218 = vmatprep.subr.mxu0 0.0
    %219 = vmatpush1.msra.mxu0 %v172
    %220 = vmatprep.subr.mxu0 0.0
    %221 = vmatpush1.msra.mxu0 %v173
    %222 = vmatprep.subr.mxu0 0.0
    %223 = vmatpush1.msra.mxu0 %v174
    %224 = vmatprep.subr.mxu0 0.0
    %225 = vmatpush1.msra.mxu0 %v175
    %226 = vmatprep.subr.mxu0 0.0
    %227 = vmatpush1.msra.mxu0 %v176
    %228 = vmatprep.subr.mxu0 0.0
    %229 = vmatpush1.msra.mxu0 %v177
    %230 = vmatprep.subr.mxu0 0.0
    %231 = vmatpush1.msra.mxu0 %v178
    %232 = vmatprep.subr.mxu0 0.0
    %233 = vmatpush1.msra.mxu0 %v179
    %234 = vmatprep.subr.mxu0 0.0
    %235 = vmatpush1.msra.mxu0 %v180
    %236 = vmatprep.subr.mxu0 0.0
    %237 = vmatpush1.msra.mxu0 %v181
    %238 = vmatprep.subr.mxu0 0.0
    %239 = vmatpush1.msra.mxu0 %v182
    %240 = vmatprep.subr.mxu0 0.0
    %241 = vmatpush1.msra.mxu0 %v183
    %242 = vmatprep.subr.mxu0 0.0
    %243 = vmatpush1.msra.mxu0 %v184
    %244 = vmatprep.subr.mxu0 0.0
    %245 = vmatpush1.msra.mxu0 %v185
    %246 = vmatprep.subr.mxu0 0.0
    %247 = vmatpush1.msra.mxu0 %v186
    %248 = vmatprep.subr.mxu0 0.0
    %249 = vmatpush1.msra.mxu0 %v187
    %250 = vmatprep.subr.mxu0 0.0
    %251 = vmatpush1.msra.mxu0 %v188
    %252 = vmatprep.subr.mxu0 0.0
    %253 = vmatpush1.msra.mxu0 %v189
    %254 = vmatprep.mubr.f32.mxu0 %v157
    %255 = vmatmul.mubr.f32.gmra.mrb[0].mxu0 %v156
    %v256 = vpop.f32.mrb[0].mxu0
    %v257 = vadd.f32 0.0, %v256
    %v258 = vpop.f32.mrb[0].mxu0
    %259 = vdwg.mxu0
    %v260 = vld [vmem:[%s4] sm:$0x1]
    %v262 = vlaneseq
    %v263 = vshrl.u32 %v262, 7
    %v264 = vsub.s32 0, %v263
    %v265 = vrot.slane %v260, %v264
    %v267 = vadd.f32 %v257, %v265
    %vm268 = vcmask 64512
    %269 = vst.msk [vmem:[#allocation8] sm:$0xff] %vm268, %v267
    // Predicated region
    $region34: #{tpu_custom_call.1} parent=1 // pred_check
      _
    $region35: #{tpu_custom_call.1} parent=1 // pred_check_branch
      %271 = sbr.rel (0) target = $region37
    $region36: #{tpu_custom_call.1} parent=1 // pred_region
      %s273 = ssub.s32 128, 128
      %274 = vsyncadd [#allocation4], %s273
      %s276 = sshll.u32 [#allocation8], 4
      %s277 = int_to_ptr.vmem [resolvable:$true] %s276
      %279 = dma.vmem_to_hbm [thread:$0]  %s277, 128, %s5, [#allocation4]
    $region37: #{tpu_custom_call.1} parent=1 // pred_fallthru
      _
    // Predicated region
    $region38: #{tpu_custom_call.1} parent=1 // pred_check
      _
    $region39: #{tpu_custom_call.1} parent=1 // pred_check_branch
      %281 = sbr.rel (0) target = $region41
    $region40: #{tpu_custom_call.1} parent=1 // pred_region
      %282 = dma.done [#allocation4], 128
    $region41: #{tpu_custom_call.1} parent=1 // pred_fallthru
      _
    %283 = vsyncpa [#allocation3], 1
    %284 = vsyncpa [#allocation6], 1
    %285 = vsyncpa [#allocation4], 1

</llo_original>
